<compile_context>
chip_gen: v7x
topology: tpu7x:2x2x1
jax: 0.10.0
libtpu: 0.0.40
codegen_flags: <defaults>
</compile_context>

<pallas_src>
import jax
import jax.numpy as jnp
from jax.experimental import pallas as pl
from jax.experimental.pallas import tpu as pltpu

IN_SIZE = 9
HID_SIZE = 128
OUT_SIZE = 12
N_MEMBERS = 5  # F9, F7_2, F5, F3, F0
FUSED_HID = N_MEMBERS * HID_SIZE  # 640


def fused_mlp_kernel(x_ref, w1_ref, b1_ref, w2_ref, b2_ref, out_ref):
    """Single-step fused ensemble: relu(x @ W1c + b1c) @ W2c + b2c."""
    h = jnp.dot(x_ref[...], w1_ref[...], preferred_element_type=jnp.float32)
    h = jnp.maximum(h + b1_ref[...], 0.0)
    y = jnp.dot(h, w2_ref[...], preferred_element_type=jnp.float32) + b2_ref[...]
    out_ref[...] = y


def fuse_params(w1, b1, w2, b2):
    """Fold the M-member ensemble into one MLP.

    w1: [M, IN, HID] -> [IN, M*HID]
    b1: [M, 1, HID]  -> [1, M*HID]
    w2: [M, HID, OUT]-> [M*HID, OUT]
    b2: [M, 1, OUT]  -> [1, OUT]   (pre-summed)
    """
    w1c = jnp.transpose(w1, (1, 0, 2)).reshape(IN_SIZE, FUSED_HID)
    b1c = b1.reshape(1, FUSED_HID)
    w2c = w2.reshape(FUSED_HID, OUT_SIZE)
    b2c = jnp.sum(b2, axis=0).reshape(1, OUT_SIZE)
    return w1c, b1c, w2c, b2c


def ensemble_forward(x, w1, b1, w2, b2):
    """x: [B, IN]; w1: [M, IN, HID]; b1: [M, 1, HID]; w2: [M, HID, OUT]; b2: [M, 1, OUT]."""
    B = x.shape[0]
    w1c, b1c, w2c, b2c = fuse_params(w1, b1, w2, b2)

    return pl.pallas_call(
        fused_mlp_kernel,
        out_shape=jax.ShapeDtypeStruct((B, OUT_SIZE), jnp.float32),
        grid=(1,),
        in_specs=[
            pl.BlockSpec((B, IN_SIZE), lambda i: (0, 0)),
            pl.BlockSpec((IN_SIZE, FUSED_HID), lambda i: (0, 0)),
            pl.BlockSpec((1, FUSED_HID), lambda i: (0, 0)),
            pl.BlockSpec((FUSED_HID, OUT_SIZE), lambda i: (0, 0)),
            pl.BlockSpec((1, OUT_SIZE), lambda i: (0, 0)),
        ],
        out_specs=pl.BlockSpec((B, OUT_SIZE), lambda i: (0, 0)),
        compiler_params=pltpu.CompilerParams(
            dimension_semantics=("arbitrary",),
        ),
    )(x, w1c, b1c, w2c, b2c)


def init_params(key):
    """Deterministic synthetic parameters, PyTorch-Linear-style uniform init."""
    ks = jax.random.split(key, 4)
    lim1 = 1.0 / jnp.sqrt(jnp.float32(IN_SIZE))
    lim2 = 1.0 / jnp.sqrt(jnp.float32(HID_SIZE))
    w1 = jax.random.uniform(ks[0], (N_MEMBERS, IN_SIZE, HID_SIZE),
                            jnp.float32, -lim1, lim1)
    b1 = jax.random.uniform(ks[1], (N_MEMBERS, 1, HID_SIZE),
                            jnp.float32, -lim1, lim1)
    w2 = jax.random.uniform(ks[2], (N_MEMBERS, HID_SIZE, OUT_SIZE),
                            jnp.float32, -lim2, lim2)
    b2 = jax.random.uniform(ks[3], (N_MEMBERS, 1, OUT_SIZE),
                            jnp.float32, -lim2, lim2)
    return w1, b1, w2, b2


def reference_forward(x, w1, b1, w2, b2):
    """Unfused per-member reference: sum_m (relu(x @ W1[m] + b1[m]) @ W2[m] + b2[m])."""
    h = jnp.maximum(jnp.einsum("bi,mih->mbh", x, w1) + b1, 0.0)
    y = jnp.einsum("mbh,mho->mbo", h, w2) + b2
    return jnp.sum(y, axis=0)


if __name__ == "__main__":
    key = jax.random.PRNGKey(0)
    k_x, k_p = jax.random.split(key)

    B = 8
    x = jax.random.normal(k_x, (B, IN_SIZE), jnp.float32)
    w1, b1, w2, b2 = init_params(k_p)

    out = ensemble_forward(x, w1, b1, w2, b2)
    out = jax.block_until_ready(out)

    ref = reference_forward(x, w1, b1, w2, b2)
    assert out.shape == (B, OUT_SIZE)
    assert jnp.allclose(out, ref, atol=1e-4, rtol=1e-4)

    print("KERNEL_OK")
</pallas_src>

<mosaic_0001>
module attributes {stable_mosaic.version = 11 : i64} {
  func.func @fused_mlp_kernel(%arg0: i32, %arg1: memref<8x9xf32, #tpu.memory_space<vmem>>, %arg2: memref<9x640xf32, #tpu.memory_space<vmem>>, %arg3: memref<1x640xf32, #tpu.memory_space<vmem>>, %arg4: memref<640x12xf32, #tpu.memory_space<vmem>>, %arg5: memref<1x12xf32, #tpu.memory_space<vmem>>, %arg6: memref<8x12xf32, #tpu.memory_space<vmem>>) attributes {dimension_semantics = [#tpu.dimension_semantics<arbitrary>], iteration_bounds = array<i64: 1>, scalar_prefetch = 0 : i64, scratch_operands = 0 : i64, tpu.core_type = #tpu.core_type<tc>, window_params = [{pipeline_mode = #tpu.pipeline_mode<synchronous>, transform_indices = @transform_0, window_bounds = array<i64: 8, 9>}, {pipeline_mode = #tpu.pipeline_mode<synchronous>, transform_indices = @transform_1, window_bounds = array<i64: 9, 640>}, {pipeline_mode = #tpu.pipeline_mode<synchronous>, transform_indices = @transform_2, window_bounds = array<i64: 1, 640>}, {pipeline_mode = #tpu.pipeline_mode<synchronous>, transform_indices = @transform_3, window_bounds = array<i64: 640, 12>}, {pipeline_mode = #tpu.pipeline_mode<synchronous>, transform_indices = @transform_4, window_bounds = array<i64: 1, 12>}, {pipeline_mode = #tpu.pipeline_mode<synchronous>, transform_indices = @transform_5, window_bounds = array<i64: 8, 12>}]} {
    %c0 = arith.constant 0 : index
    %c0_0 = arith.constant 0 : index
    %0 = vector.load %arg1[%c0, %c0_0] : memref<8x9xf32, #tpu.memory_space<vmem>>, vector<8x9xf32>
    %c0_1 = arith.constant 0 : index
    %c0_2 = arith.constant 0 : index
    %1 = vector.load %arg2[%c0_1, %c0_2] : memref<9x640xf32, #tpu.memory_space<vmem>>, vector<9x640xf32>
    %cst = arith.constant dense<0.000000e+00> : vector<8x640xf32>
    %2 = tpu.matmul %0, %1, %cst {dimension_numbers = #tpu.dot_dimension_numbers<[1], [0], [0], [1], [0, 0, 1, 1], [], []>} : vector<8x9xf32>, vector<9x640xf32>, vector<8x640xf32> -> vector<8x640xf32>
    %c0_3 = arith.constant 0 : index
    %c0_4 = arith.constant 0 : index
    %3 = vector.load %arg3[%c0_3, %c0_4] : memref<1x640xf32, #tpu.memory_space<vmem>>, vector<1x640xf32>
    %4 = vector.broadcast %3 : vector<1x640xf32> to vector<8x640xf32>
    %5 = arith.addf %2, %4 : vector<8x640xf32>
    %cst_5 = arith.constant 0.000000e+00 : f32
    %6 = vector.broadcast %cst_5 : f32 to vector<8x640xf32>
    %7 = arith.maximumf %5, %6 : vector<8x640xf32>
    %c0_6 = arith.constant 0 : index
    %c0_7 = arith.constant 0 : index
    %8 = vector.load %arg4[%c0_6, %c0_7] : memref<640x12xf32, #tpu.memory_space<vmem>>, vector<640x12xf32>
    %cst_8 = arith.constant dense<0.000000e+00> : vector<8x12xf32>
    %9 = tpu.matmul %7, %8, %cst_8 {dimension_numbers = #tpu.dot_dimension_numbers<[1], [0], [0], [1], [0, 0, 1, 1], [], []>} : vector<8x640xf32>, vector<640x12xf32>, vector<8x12xf32> -> vector<8x12xf32>
    %c0_9 = arith.constant 0 : index
    %c0_10 = arith.constant 0 : index
    %10 = vector.load %arg5[%c0_9, %c0_10] : memref<1x12xf32, #tpu.memory_space<vmem>>, vector<1x12xf32>
    %11 = vector.broadcast %10 : vector<1x12xf32> to vector<8x12xf32>
    %12 = arith.addf %9, %11 : vector<8x12xf32>
    %c0_11 = arith.constant 0 : index
    %c0_12 = arith.constant 0 : index
    %13 = vector.load %arg6[%c0_11, %c0_12] : memref<8x12xf32, #tpu.memory_space<vmem>>, vector<8x12xf32>
    tpu.vector_store %arg6[%c0_11, %c0_12], %12 {strides = array<i32>} : memref<8x12xf32, #tpu.memory_space<vmem>>, vector<8x12xf32>,
    return
  }
  func.func @transform_0(%arg0: i32) -> (i32, i32) {
    %c0_i32 = arith.constant 0 : i32
    %c0_i32_0 = arith.constant 0 : i32
    %c0_i32_1 = arith.constant 0 : i32
    return %c0_i32, %c0_i32_0 : i32, i32
  }
  func.func @transform_1(%arg0: i32) -> (i32, i32) {
    %c0_i32 = arith.constant 0 : i32
    %c0_i32_0 = arith.constant 0 : i32
    %c0_i32_1 = arith.constant 0 : i32
    return %c0_i32, %c0_i32_0 : i32, i32
  }
  func.func @transform_2(%arg0: i32) -> (i32, i32) {
    %c0_i32 = arith.constant 0 : i32
    %c0_i32_0 = arith.constant 0 : i32
    %c0_i32_1 = arith.constant 0 : i32
    return %c0_i32, %c0_i32_0 : i32, i32
  }
  func.func @transform_3(%arg0: i32) -> (i32, i32) {
    %c0_i32 = arith.constant 0 : i32
    %c0_i32_0 = arith.constant 0 : i32
    %c0_i32_1 = arith.constant 0 : i32
    return %c0_i32, %c0_i32_0 : i32, i32
  }
  func.func @transform_4(%arg0: i32) -> (i32, i32) {
    %c0_i32 = arith.constant 0 : i32
    %c0_i32_0 = arith.constant 0 : i32
    %c0_i32_1 = arith.constant 0 : i32
    return %c0_i32, %c0_i32_0 : i32, i32
  }
  func.func @transform_5(%arg0: i32) -> (i32, i32) {
    %c0_i32 = arith.constant 0 : i32
    %c0_i32_0 = arith.constant 0 : i32
    %c0_i32_1 = arith.constant 0 : i32
    return %c0_i32, %c0_i32_0 : i32, i32
  }
}

</mosaic_0001>

<llo_original>
// kernel: tpu_custom_call.1
$region0: #{tpu_custom_call.1}
  #allocation0 [shape = 'u32[]', space=smem, size = 0x4, offset = 0x4, fixed_abs, tag = 'smem constant byte address 0x4 - core index']
  #allocation1 [shape = 'u32[144,128]{1,0:T(1,128)}', space=vmem, size = 0x12000, scoped, tag = 'internal scratch']
  %s0 = inlined_call_operand.vmem [shape: f32[8,9], index: 0, kind: input, shape index: {}]
  %s1 = inlined_call_operand.vmem [shape: f32[9,640], index: 1, kind: input, shape index: {}]
  %s2 = inlined_call_operand.vmem [shape: f32[1,640], index: 2, kind: input, shape index: {}]
  %s3 = inlined_call_operand.vmem [shape: f32[640,12], index: 3, kind: input, shape index: {}]
  %s4 = inlined_call_operand.vmem [shape: f32[1,12], index: 4, kind: input, shape index: {}]
  %s5 = inlined_call_operand.hbm [shape: f32[8,12], index: 5, kind: output, shape index: {}]
  %s6 = sld [smem:[#allocation0]]
  $region30: #{tpu_custom_call.1} parent=0
    _
  %s8 = ssub.s32 1, %s6
  %s9 = scalar_select 0, %s8, %s6
  $region1: #{tpu_custom_call.1} parent=0
    #allocation2 [shape = 'u8[4096]{0}', space=vmem, size = 0x1000, scoped, tag = 'output window, operand 0, single buffered']
    #allocation3 [shape = 's32[1]{0}', space=sflag, size = 0x4, scoped, tag = 'scoped memory for tpu_custom_call.1']
    %10 = vsyncpa [#allocation3], 0
    // Predicated region
    $region2: #{tpu_custom_call.1} parent=1 // pred_check
      _
    $region3: #{tpu_custom_call.1} parent=1 // pred_check_branch
      %12 = sbr.rel (0) target = $region5
    $region4: #{tpu_custom_call.1} parent=1 // pred_region
      _
    $region5: #{tpu_custom_call.1} parent=1 // pred_fallthru
      _
    // Predicated region
    $region6: #{tpu_custom_call.1} parent=1 // pred_check
      _
    $region7: #{tpu_custom_call.1} parent=1 // pred_check_branch
      %14 = sbr.rel (0) target = $region9
    $region8: #{tpu_custom_call.1} parent=1 // pred_region
      _
    $region9: #{tpu_custom_call.1} parent=1 // pred_fallthru
      _
    // Predicated region
    $region10: #{tpu_custom_call.1} parent=1 // pred_check
      _
    $region11: #{tpu_custom_call.1} parent=1 // pred_check_branch
      %16 = sbr.rel (0) target = $region13
    $region12: #{tpu_custom_call.1} parent=1 // pred_region
      _
    $region13: #{tpu_custom_call.1} parent=1 // pred_fallthru
      _
    // Predicated region
    $region14: #{tpu_custom_call.1} parent=1 // pred_check
      _
    $region15: #{tpu_custom_call.1} parent=1 // pred_check_branch
      %18 = sbr.rel (0) target = $region17
    $region16: #{tpu_custom_call.1} parent=1 // pred_region
      _
    $region17: #{tpu_custom_call.1} parent=1 // pred_fallthru
      _
    // Predicated region
    $region18: #{tpu_custom_call.1} parent=1 // pred_check
      _
    $region19: #{tpu_custom_call.1} parent=1 // pred_check_branch
      %20 = sbr.rel (0) target = $region21
    $region20: #{tpu_custom_call.1} parent=1 // pred_region
      _
    $region21: #{tpu_custom_call.1} parent=1 // pred_fallthru
      _
    %v21 = vld [vmem:[%s0] sm:$0xff]
    %v22 = vld [vmem:[%s1] sm:$0xff]
    %v23 = vld [vmem:[%s1 + $0x8] sm:$0xff]
    %v24 = vld [vmem:[%s1 + $0x10] sm:$0xff]
    %v25 = vld [vmem:[%s1 + $0x18] sm:$0xff]
    %v26 = vld [vmem:[%s1 + $0x20] sm:$0xff]
    %v27 = vld [vmem:[%s1 + $0x28] sm:$0x1]
    %v28 = vld [vmem:[%s1 + $0x30] sm:$0x1]
    %v29 = vld [vmem:[%s1 + $0x38] sm:$0x1]
    %v30 = vld [vmem:[%s1 + $0x40] sm:$0x1]
    %v31 = vld [vmem:[%s1 + $0x48] sm:$0x1]
    %v32 = vld [vmem:[%s2] sm:$0x1f]
    %v34 = vlaneseq
    %v35 = vshrl.u32 %v34, 7
    %v36 = vsub.s32 0, %v35
    %v37 = vrot.slane %v32, %v36
    %v38 = vlaneseq
    %v39 = vshrl.u32 %v38, 7
    %v40 = vsub.s32 1, %v39
    %v41 = vrot.slane %v32, %v40
    %v42 = vlaneseq
    %v43 = vshrl.u32 %v42, 7
    %v44 = vsub.s32 2, %v43
    %v45 = vrot.slane %v32, %v44
    %v46 = vlaneseq
    %v47 = vshrl.u32 %v46, 7
    %v48 = vsub.s32 3, %v47
    %v49 = vrot.slane %v32, %v48
    %v50 = vlaneseq
    %v51 = vshrl.u32 %v50, 7
    %v52 = vsub.s32 4, %v51
    %v53 = vrot.slane %v32, %v52
    %vm59 = vcmask 72704
    %v61 = vsel %vm59, %v21, 0
    %vm63 = vcmask 1040384
    %v65 = vsel %vm63, %v27, 0
    %v68 = vsel %vm63, %v28, 0
    %v71 = vsel %vm63, %v29, 0
    %v74 = vsel %vm63, %v30, 0
    %v77 = vsel %vm63, %v31, 0
    %79 = vmatprep.subr.mxu0 %v23
    %80 = vmatpush1.msra.mxu0 %v22
    %81 = vmatprep.subr.mxu0 %v68
    %82 = vmatpush1.msra.mxu0 %v65
    %83 = vmatprep.subr.mxu0 0.0
    %84 = vmatpush1.msra.mxu0 0.0
    %85 = vmatprep.subr.mxu0 0.0
    %86 = vmatpush1.msra.mxu0 0.0
    %87 = vmatprep.subr.mxu0 0.0
    %88 = vmatpush1.msra.mxu0 0.0
    %89 = vmatprep.subr.mxu0 0.0
    %90 = vmatpush1.msra.mxu0 0.0
    %91 = vmatprep.subr.mxu0 0.0
    %92 = vmatpush1.msra.mxu0 0.0
    %93 = vmatprep.subr.mxu0 0.0
    %94 = vmatpush1.msra.mxu0 0.0
    %95 = vmatprep.subr.mxu0 0.0
    %96 = vmatpush1.msra.mxu0 0.0
    %97 = vmatprep.subr.mxu0 0.0
    %98 = vmatpush1.msra.mxu0 0.0
    %99 = vmatprep.subr.mxu0 0.0
    %100 = vmatpush1.msra.mxu0 0.0
    %101 = vmatprep.subr.mxu0 0.0
    %102 = vmatpush1.msra.mxu0 0.0
    %103 = vmatprep.subr.mxu0 0.0
    %104 = vmatpush1.msra.mxu0 0.0
    %105 = vmatprep.subr.mxu0 0.0
    %106 = vmatpush1.msra.mxu0 0.0
    %107 = vmatprep.subr.mxu0 0.0
    %108 = vmatpush1.msra.mxu0 0.0
    %109 = vmatprep.subr.mxu0 0.0
    %110 = vmatpush1.msra.mxu0 0.0
    %111 = vmatprep.subr.mxu0 0.0
    %112 = vmatpush1.msra.mxu0 0.0
    %113 = vmatprep.subr.mxu0 0.0
    %114 = vmatpush1.msra.mxu0 0.0
    %115 = vmatprep.subr.mxu0 0.0
    %116 = vmatpush1.msra.mxu0 0.0
    %117 = vmatprep.subr.mxu0 0.0
    %118 = vmatpush1.msra.mxu0 0.0
    %119 = vmatprep.subr.mxu0 0.0
    %120 = vmatpush1.msra.mxu0 0.0
    %121 = vmatprep.subr.mxu0 0.0
    %122 = vmatpush1.msra.mxu0 0.0
    %123 = vmatprep.subr.mxu0 0.0
    %124 = vmatpush1.msra.mxu0 0.0
    %125 = vmatprep.subr.mxu0 0.0
    %126 = vmatpush1.msra.mxu0 0.0
    %127 = vmatprep.subr.mxu0 0.0
    %128 = vmatpush1.msra.mxu0 0.0
    %129 = vmatprep.subr.mxu0 0.0
    %130 = vmatpush1.msra.mxu0 0.0
    %131 = vmatprep.subr.mxu0 0.0
    %132 = vmatpush1.msra.mxu0 0.0
    %133 = vmatprep.subr.mxu0 0.0
    %134 = vmatpush1.msra.mxu0 0.0
    %135 = vmatprep.subr.mxu0 0.0
    %136 = vmatpush1.msra.mxu0 0.0
    %137 = vmatprep.subr.mxu0 0.0
    %138 = vmatpush1.msra.mxu0 0.0
    %139 = vmatprep.subr.mxu0 0.0
    %140 = vmatpush1.msra.mxu0 0.0
    %141 = vmatprep.subr.mxu0 0.0
    %142 = vmatpush1.msra.mxu0 0.0
    %143 = vmatprep.mubr.f32.mxu0 0.0
    %144 = vmatmul.mubr.f32.gmra.mrb[0].mxu0 %v61
    %v145 = vpop.f32.mrb[0].mxu0
    %v146 = vadd.f32 %v37, %v145
    %v147 = vpop.f32.mrb[0].mxu0
    %v148 = vadd.f32 %v41, %v147
    %149 = vdwg.mxu0
    %150 = vmatprep.subr.mxu0 %v25
    %151 = vmatpush1.msra.mxu0 %v24
    %152 = vmatprep.subr.mxu0 %v74
    %153 = vmatpush1.msra.mxu0 %v71
    %154 = vmatprep.subr.mxu0 0.0
    %155 = vmatpush1.msra.mxu0 0.0
    %156 = vmatprep.subr.mxu0 0.0
    %157 = vmatpush1.msra.mxu0 0.0
    %158 = vmatprep.subr.mxu0 0.0
    %159 = vmatpush1.msra.mxu0 0.0
    %160 = vmatprep.subr.mxu0 0.0
    %161 = vmatpush1.msra.mxu0 0.0
    %162 = vmatprep.subr.mxu0 0.0
    %163 = vmatpush1.msra.mxu0 0.0
    %164 = vmatprep.subr.mxu0 0.0
    %165 = vmatpush1.msra.mxu0 0.0
    %166 = vmatprep.subr.mxu0 0.0
    %167 = vmatpush1.msra.mxu0 0.0
    %168 = vmatprep.subr.mxu0 0.0
    %169 = vmatpush1.msra.mxu0 0.0
    %170 = vmatprep.subr.mxu0 0.0
    %171 = vmatpush1.msra.mxu0 0.0
    %172 = vmatprep.subr.mxu0 0.0
    %173 = vmatpush1.msra.mxu0 0.0
    %174 = vmatprep.subr.mxu0 0.0
    %175 = vmatpush1.msra.mxu0 0.0
    %176 = vmatprep.subr.mxu0 0.0
    %177 = vmatpush1.msra.mxu0 0.0
    %178 = vmatprep.subr.mxu0 0.0
    %179 = vmatpush1.msra.mxu0 0.0
    %180 = vmatprep.subr.mxu0 0.0
    %181 = vmatpush1.msra.mxu0 0.0
    %182 = vmatprep.subr.mxu0 0.0
    %183 = vmatpush1.msra.mxu0 0.0
    %184 = vmatprep.subr.mxu0 0.0
    %185 = vmatpush1.msra.mxu0 0.0
    %186 = vmatprep.subr.mxu0 0.0
    %187 = vmatpush1.msra.mxu0 0.0
    %188 = vmatprep.subr.mxu0 0.0
    %189 = vmatpush1.msra.mxu0 0.0
    %190 = vmatprep.subr.mxu0 0.0
    %191 = vmatpush1.msra.mxu0 0.0
    %192 = vmatprep.subr.mxu0 0.0
    %193 = vmatpush1.msra.mxu0 0.0
    %194 = vmatprep.subr.mxu0 0.0
    %195 = vmatpush1.msra.mxu0 0.0
    %196 = vmatprep.subr.mxu0 0.0
    %197 = vmatpush1.msra.mxu0 0.0
    %198 = vmatprep.subr.mxu0 0.0
    %199 = vmatpush1.msra.mxu0 0.0
    %200 = vmatprep.subr.mxu0 0.0
    %201 = vmatpush1.msra.mxu0 0.0
    %202 = vmatprep.subr.mxu0 0.0
    %203 = vmatpush1.msra.mxu0 0.0
    %204 = vmatprep.subr.mxu0 0.0
    %205 = vmatpush1.msra.mxu0 0.0
    %206 = vmatprep.subr.mxu0 0.0
    %207 = vmatpush1.msra.mxu0 0.0
    %208 = vmatprep.subr.mxu0 0.0
    %209 = vmatpush1.msra.mxu0 0.0
    %210 = vmatprep.subr.mxu0 0.0
    %211 = vmatpush1.msra.mxu0 0.0
    %212 = vmatprep.subr.mxu0 0.0
    %213 = vmatpush1.msra.mxu0 0.0
    %214 = vmatprep.mubr.f32.mxu0 0.0
    %215 = vmatmul.mubr.f32.gmra.mrb[0].mxu0 %v61
    %v216 = vpop.f32.mrb[0].mxu0
    %v217 = vadd.f32 %v45, %v216
    %v218 = vpop.f32.mrb[0].mxu0
    %v219 = vadd.f32 %v49, %v218
    %220 = vdwg.mxu0
    %221 = vmatprep.subr.mxu0 0.0
    %222 = vmatpush1.msra.mxu0 %v26
    %223 = vmatprep.subr.mxu0 0.0
    %224 = vmatpush1.msra.mxu0 %v77
    %225 = vmatprep.subr.mxu0 0.0
    %226 = vmatpush1.msra.mxu0 0.0
    %227 = vmatprep.subr.mxu0 0.0
    %228 = vmatpush1.msra.mxu0 0.0
    %229 = vmatprep.subr.mxu0 0.0
    %230 = vmatpush1.msra.mxu0 0.0
    %231 = vmatprep.subr.mxu0 0.0
    %232 = vmatpush1.msra.mxu0 0.0
    %233 = vmatprep.subr.mxu0 0.0
    %234 = vmatpush1.msra.mxu0 0.0
    %235 = vmatprep.subr.mxu0 0.0
    %236 = vmatpush1.msra.mxu0 0.0
    %237 = vmatprep.subr.mxu0 0.0
    %238 = vmatpush1.msra.mxu0 0.0
    %239 = vmatprep.subr.mxu0 0.0
    %240 = vmatpush1.msra.mxu0 0.0
    %241 = vmatprep.subr.mxu0 0.0
    %242 = vmatpush1.msra.mxu0 0.0
    %243 = vmatprep.subr.mxu0 0.0
    %244 = vmatpush1.msra.mxu0 0.0
    %245 = vmatprep.subr.mxu0 0.0
    %246 = vmatpush1.msra.mxu0 0.0
    %247 = vmatprep.subr.mxu0 0.0
    %248 = vmatpush1.msra.mxu0 0.0
    %249 = vmatprep.subr.mxu0 0.0
    %250 = vmatpush1.msra.mxu0 0.0
    %251 = vmatprep.subr.mxu0 0.0
    %252 = vmatpush1.msra.mxu0 0.0
    %253 = vmatprep.subr.mxu0 0.0
    %254 = vmatpush1.msra.mxu0 0.0
    %255 = vmatprep.subr.mxu0 0.0
    %256 = vmatpush1.msra.mxu0 0.0
    %257 = vmatprep.subr.mxu0 0.0
    %258 = vmatpush1.msra.mxu0 0.0
    %259 = vmatprep.subr.mxu0 0.0
    %260 = vmatpush1.msra.mxu0 0.0
    %261 = vmatprep.subr.mxu0 0.0
    %262 = vmatpush1.msra.mxu0 0.0
    %263 = vmatprep.subr.mxu0 0.0
    %264 = vmatpush1.msra.mxu0 0.0
    %265 = vmatprep.subr.mxu0 0.0
    %266 = vmatpush1.msra.mxu0 0.0
    %267 = vmatprep.subr.mxu0 0.0
    %268 = vmatpush1.msra.mxu0 0.0
    %269 = vmatprep.subr.mxu0 0.0
    %270 = vmatpush1.msra.mxu0 0.0
    %271 = vmatprep.subr.mxu0 0.0
    %272 = vmatpush1.msra.mxu0 0.0
    %273 = vmatprep.subr.mxu0 0.0
    %274 = vmatpush1.msra.mxu0 0.0
    %275 = vmatprep.subr.mxu0 0.0
    %276 = vmatpush1.msra.mxu0 0.0
    %277 = vmatprep.subr.mxu0 0.0
    %278 = vmatpush1.msra.mxu0 0.0
    %279 = vmatprep.subr.mxu0 0.0
    %280 = vmatpush1.msra.mxu0 0.0
    %281 = vmatprep.subr.mxu0 0.0
    %282 = vmatpush1.msra.mxu0 0.0
    %283 = vmatprep.subr.mxu0 0.0
    %284 = vmatpush1.msra.mxu0 0.0
    %285 = vmatprep.mubr.f32.mxu0 0.0
    %286 = vmatmul.mubr.f32.gmra.mrb[0].mxu0 %v61
    %v287 = vpop.f32.mrb[0].mxu0
    %v288 = vadd.f32 %v53, %v287
    %v289 = vpop.f32.mrb[0].mxu0
    %290 = vdwg.mxu0
    %v291 = vmax.f32 %v146, 0.0
    %v292 = vmax.f32 %v148, 0.0
    %v293 = vmax.f32 %v217, 0.0
    %v294 = vmax.f32 %v219, 0.0
    %v295 = vmax.f32 %v288, 0.0
    %v296 = vld [vmem:[%s3] sm:$0xff]
    %v297 = vld [vmem:[%s3 + $0x8] sm:$0xff]
    %v298 = vld [vmem:[%s3 + $0x10] sm:$0xff]
    %v299 = vld [vmem:[%s3 + $0x18] sm:$0xff]
    %v300 = vld [vmem:[%s3 + $0x20] sm:$0xff]
    %v301 = vld [vmem:[%s3 + $0x28] sm:$0xff]
    %v302 = vld [vmem:[%s3 + $0x30] sm:$0xff]
    %v303 = vld [vmem:[%s3 + $0x38] sm:$0xff]
    %v304 = vld [vmem:[%s3 + $0x40] sm:$0xff]
    %v305 = vld [vmem:[%s3 + $0x48] sm:$0xff]
    %v306 = vld [vmem:[%s3 + $0x50] sm:$0xff]
    %v307 = vld [vmem:[%s3 + $0x58] sm:$0xff]
    %v308 = vld [vmem:[%s3 + $0x60] sm:$0xff]
    %v309 = vld [vmem:[%s3 + $0x68] sm:$0xff]
    %v310 = vld [vmem:[%s3 + $0x70] sm:$0xff]
    %v311 = vld [vmem:[%s3 + $0x78] sm:$0xff]
    %v312 = vld [vmem:[%s3 + $0x80] sm:$0xff]
    %v313 = vld [vmem:[%s3 + $0x88] sm:$0xff]
    %v314 = vld [vmem:[%s3 + $0x90] sm:$0xff]
    %v315 = vld [vmem:[%s3 + $0x98] sm:$0xff]
    %v316 = vld [vmem:[%s3 + $0xa0] sm:$0xff]
    %v317 = vld [vmem:[%s3 + $0xa8] sm:$0xff]
    %v318 = vld [vmem:[%s3 + $0xb0] sm:$0xff]
    %v319 = vld [vmem:[%s3 + $0xb8] sm:$0xff]
    %v320 = vld [vmem:[%s3 + $0xc0] sm:$0xff]
    %v321 = vld [vmem:[%s3 + $0xc8] sm:$0xff]
    %v322 = vld [vmem:[%s3 + $0xd0] sm:$0xff]
    %v323 = vld [vmem:[%s3 + $0xd8] sm:$0xff]
    %v324 = vld [vmem:[%s3 + $0xe0] sm:$0xff]
    %v325 = vld [vmem:[%s3 + $0xe8] sm:$0xff]
    %v326 = vld [vmem:[%s3 + $0xf0] sm:$0xff]
    %v327 = vld [vmem:[%s3 + $0xf8] sm:$0xff]
    %v328 = vld [vmem:[%s3 + $0x100] sm:$0xff]
    %v329 = vld [vmem:[%s3 + $0x108] sm:$0xff]
    %v330 = vld [vmem:[%s3 + $0x110] sm:$0xff]
    %v331 = vld [vmem:[%s3 + $0x118] sm:$0xff]
    %v332 = vld [vmem:[%s3 + $0x120] sm:$0xff]
    %v333 = vld [vmem:[%s3 + $0x128] sm:$0xff]
    %v334 = vld [vmem:[%s3 + $0x130] sm:$0xff]
    %v335 = vld [vmem:[%s3 + $0x138] sm:$0xff]
    %v336 = vld [vmem:[%s3 + $0x140] sm:$0xff]
    %v337 = vld [vmem:[%s3 + $0x148] sm:$0xff]
    %v338 = vld [vmem:[%s3 + $0x150] sm:$0xff]
    %v339 = vld [vmem:[%s3 + $0x158] sm:$0xff]
    %v340 = vld [vmem:[%s3 + $0x160] sm:$0xff]
    %v341 = vld [vmem:[%s3 + $0x168] sm:$0xff]
    %v342 = vld [vmem:[%s3 + $0x170] sm:$0xff]
    %v343 = vld [vmem:[%s3 + $0x178] sm:$0xff]
    %v344 = vld [vmem:[%s3 + $0x180] sm:$0xff]
    %v345 = vld [vmem:[%s3 + $0x188] sm:$0xff]
    %v346 = vld [vmem:[%s3 + $0x190] sm:$0xff]
    %v347 = vld [vmem:[%s3 + $0x198] sm:$0xff]
    %v348 = vld [vmem:[%s3 + $0x1a0] sm:$0xff]
    %v349 = vld [vmem:[%s3 + $0x1a8] sm:$0xff]
    %v350 = vld [vmem:[%s3 + $0x1b0] sm:$0xff]
    %v351 = vld [vmem:[%s3 + $0x1b8] sm:$0xff]
    %v352 = vld [vmem:[%s3 + $0x1c0] sm:$0xff]
    %v353 = vld [vmem:[%s3 + $0x1c8] sm:$0xff]
    %v354 = vld [vmem:[%s3 + $0x1d0] sm:$0xff]
    %v355 = vld [vmem:[%s3 + $0x1d8] sm:$0xff]
    %v356 = vld [vmem:[%s3 + $0x1e0] sm:$0xff]
    %v357 = vld [vmem:[%s3 + $0x1e8] sm:$0xff]
    %v358 = vld [vmem:[%s3 + $0x1f0] sm:$0xff]
    %v359 = vld [vmem:[%s3 + $0x1f8] sm:$0xff]
    %v360 = vld [vmem:[%s3 + $0x200] sm:$0xff]
    %v361 = vld [vmem:[%s3 + $0x208] sm:$0xff]
    %v362 = vld [vmem:[%s3 + $0x210] sm:$0xff]
    %v363 = vld [vmem:[%s3 + $0x218] sm:$0xff]
    %v364 = vld [vmem:[%s3 + $0x220] sm:$0xff]
    %v365 = vld [vmem:[%s3 + $0x228] sm:$0xff]
    %v366 = vld [vmem:[%s3 + $0x230] sm:$0xff]
    %v367 = vld [vmem:[%s3 + $0x238] sm:$0xff]
    %v368 = vld [vmem:[%s3 + $0x240] sm:$0xff]
    %v369 = vld [vmem:[%s3 + $0x248] sm:$0xff]
    %v370 = vld [vmem:[%s3 + $0x250] sm:$0xff]
    %v371 = vld [vmem:[%s3 + $0x258] sm:$0xff]
    %v372 = vld [vmem:[%s3 + $0x260] sm:$0xff]
    %v373 = vld [vmem:[%s3 + $0x268] sm:$0xff]
    %v374 = vld [vmem:[%s3 + $0x270] sm:$0xff]
    %v375 = vld [vmem:[%s3 + $0x278] sm:$0xff]
    %v376 = vld [vmem:[%s4] sm:$0x1]
    %v378 = vlaneseq
    %v379 = vshrl.u32 %v378, 7
    %v380 = vsub.s32 0, %v379
    %v381 = vrot.slane %v376, %v380
    %383 = vmatprep.subr.mxu0 0.0
    %384 = vmatpush1.msra.mxu0 %v296
    %385 = vmatprep.subr.mxu0 0.0
    %386 = vmatpush1.msra.mxu0 %v297
    %387 = vmatprep.subr.mxu0 0.0
    %388 = vmatpush1.msra.mxu0 %v298
    %389 = vmatprep.subr.mxu0 0.0
    %390 = vmatpush1.msra.mxu0 %v299
    %391 = vmatprep.subr.mxu0 0.0
    %392 = vmatpush1.msra.mxu0 %v300
    %393 = vmatprep.subr.mxu0 0.0
    %394 = vmatpush1.msra.mxu0 %v301
    %395 = vmatprep.subr.mxu0 0.0
    %396 = vmatpush1.msra.mxu0 %v302
    %397 = vmatprep.subr.mxu0 0.0
    %398 = vmatpush1.msra.mxu0 %v303
    %399 = vmatprep.subr.mxu0 0.0
    %400 = vmatpush1.msra.mxu0 %v304
    %401 = vmatprep.subr.mxu0 0.0
    %402 = vmatpush1.msra.mxu0 %v305
    %403 = vmatprep.subr.mxu0 0.0
    %404 = vmatpush1.msra.mxu0 %v306
    %405 = vmatprep.subr.mxu0 0.0
    %406 = vmatpush1.msra.mxu0 %v307
    %407 = vmatprep.subr.mxu0 0.0
    %408 = vmatpush1.msra.mxu0 %v308
    %409 = vmatprep.subr.mxu0 0.0
    %410 = vmatpush1.msra.mxu0 %v309
    %411 = vmatprep.subr.mxu0 0.0
    %412 = vmatpush1.msra.mxu0 %v310
    %413 = vmatprep.subr.mxu0 0.0
    %414 = vmatpush1.msra.mxu0 %v311
    %415 = vmatprep.subr.mxu0 0.0
    %416 = vmatpush1.msra.mxu0 %v312
    %417 = vmatprep.subr.mxu0 0.0
    %418 = vmatpush1.msra.mxu0 %v313
    %419 = vmatprep.subr.mxu0 0.0
    %420 = vmatpush1.msra.mxu0 %v314
    %421 = vmatprep.subr.mxu0 0.0
    %422 = vmatpush1.msra.mxu0 %v315
    %423 = vmatprep.subr.mxu0 0.0
    %424 = vmatpush1.msra.mxu0 %v316
    %425 = vmatprep.subr.mxu0 0.0
    %426 = vmatpush1.msra.mxu0 %v317
    %427 = vmatprep.subr.mxu0 0.0
    %428 = vmatpush1.msra.mxu0 %v318
    %429 = vmatprep.subr.mxu0 0.0
    %430 = vmatpush1.msra.mxu0 %v319
    %431 = vmatprep.subr.mxu0 0.0
    %432 = vmatpush1.msra.mxu0 %v320
    %433 = vmatprep.subr.mxu0 0.0
    %434 = vmatpush1.msra.mxu0 %v321
    %435 = vmatprep.subr.mxu0 0.0
    %436 = vmatpush1.msra.mxu0 %v322
    %437 = vmatprep.subr.mxu0 0.0
    %438 = vmatpush1.msra.mxu0 %v323
    %439 = vmatprep.subr.mxu0 0.0
    %440 = vmatpush1.msra.mxu0 %v324
    %441 = vmatprep.subr.mxu0 0.0
    %442 = vmatpush1.msra.mxu0 %v325
    %443 = vmatprep.subr.mxu0 0.0
    %444 = vmatpush1.msra.mxu0 %v326
    %445 = vmatprep.subr.mxu0 0.0
    %446 = vmatpush1.msra.mxu0 %v327
    %447 = vmatprep.mubr.f32.mxu0 %v292
    %448 = vmatmul.mubr.f32.gmra.mrb[0].mxu0 %v291
    %v449 = vpop.f32.mrb[0].mxu0
    %v450 = vadd.f32 %v381, %v449
    %v451 = vpop.f32.mrb[0].mxu0
    %452 = vdwg.mxu0
    %453 = vmatprep.subr.mxu0 0.0
    %454 = vmatpush1.msra.mxu0 %v328
    %455 = vmatprep.subr.mxu0 0.0
    %456 = vmatpush1.msra.mxu0 %v329
    %457 = vmatprep.subr.mxu0 0.0
    %458 = vmatpush1.msra.mxu0 %v330
    %459 = vmatprep.subr.mxu0 0.0
    %460 = vmatpush1.msra.mxu0 %v331
    %461 = vmatprep.subr.mxu0 0.0
    %462 = vmatpush1.msra.mxu0 %v332
    %463 = vmatprep.subr.mxu0 0.0
    %464 = vmatpush1.msra.mxu0 %v333
    %465 = vmatprep.subr.mxu0 0.0
    %466 = vmatpush1.msra.mxu0 %v334
    %467 = vmatprep.subr.mxu0 0.0
    %468 = vmatpush1.msra.mxu0 %v335
    %469 = vmatprep.subr.mxu0 0.0
    %470 = vmatpush1.msra.mxu0 %v336
    %471 = vmatprep.subr.mxu0 0.0
    %472 = vmatpush1.msra.mxu0 %v337
    %473 = vmatprep.subr.mxu0 0.0
    %474 = vmatpush1.msra.mxu0 %v338
    %475 = vmatprep.subr.mxu0 0.0
    %476 = vmatpush1.msra.mxu0 %v339
    %477 = vmatprep.subr.mxu0 0.0
    %478 = vmatpush1.msra.mxu0 %v340
    %479 = vmatprep.subr.mxu0 0.0
    %480 = vmatpush1.msra.mxu0 %v341
    %481 = vmatprep.subr.mxu0 0.0
    %482 = vmatpush1.msra.mxu0 %v342
    %483 = vmatprep.subr.mxu0 0.0
    %484 = vmatpush1.msra.mxu0 %v343
    %485 = vmatprep.subr.mxu0 0.0
    %486 = vmatpush1.msra.mxu0 %v344
    %487 = vmatprep.subr.mxu0 0.0
    %488 = vmatpush1.msra.mxu0 %v345
    %489 = vmatprep.subr.mxu0 0.0
    %490 = vmatpush1.msra.mxu0 %v346
    %491 = vmatprep.subr.mxu0 0.0
    %492 = vmatpush1.msra.mxu0 %v347
    %493 = vmatprep.subr.mxu0 0.0
    %494 = vmatpush1.msra.mxu0 %v348
    %495 = vmatprep.subr.mxu0 0.0
    %496 = vmatpush1.msra.mxu0 %v349
    %497 = vmatprep.subr.mxu0 0.0
    %498 = vmatpush1.msra.mxu0 %v350
    %499 = vmatprep.subr.mxu0 0.0
    %500 = vmatpush1.msra.mxu0 %v351
    %501 = vmatprep.subr.mxu0 0.0
    %502 = vmatpush1.msra.mxu0 %v352
    %503 = vmatprep.subr.mxu0 0.0
    %504 = vmatpush1.msra.mxu0 %v353
    %505 = vmatprep.subr.mxu0 0.0
    %506 = vmatpush1.msra.mxu0 %v354
    %507 = vmatprep.subr.mxu0 0.0
    %508 = vmatpush1.msra.mxu0 %v355
    %509 = vmatprep.subr.mxu0 0.0
    %510 = vmatpush1.msra.mxu0 %v356
    %511 = vmatprep.subr.mxu0 0.0
    %512 = vmatpush1.msra.mxu0 %v357
    %513 = vmatprep.subr.mxu0 0.0
    %514 = vmatpush1.msra.mxu0 %v358
    %515 = vmatprep.subr.mxu0 0.0
    %516 = vmatpush1.msra.mxu0 %v359
    %517 = vmatprep.mubr.f32.mxu0 %v294
    %518 = vmatmul.mubr.f32.gmra.mrb[0].mxu0 %v293
    %v519 = vpop.f32.mrb[0].mxu0
    %v520 = vadd.f32 %v450, %v519
    %v521 = vpop.f32.mrb[0].mxu0
    %522 = vdwg.mxu0
    %523 = vmatprep.subr.mxu0 0.0
    %524 = vmatpush1.msra.mxu0 %v360
    %525 = vmatprep.subr.mxu0 0.0
    %526 = vmatpush1.msra.mxu0 %v361
    %527 = vmatprep.subr.mxu0 0.0
    %528 = vmatpush1.msra.mxu0 %v362
    %529 = vmatprep.subr.mxu0 0.0
    %530 = vmatpush1.msra.mxu0 %v363
    %531 = vmatprep.subr.mxu0 0.0
    %532 = vmatpush1.msra.mxu0 %v364
    %533 = vmatprep.subr.mxu0 0.0
    %534 = vmatpush1.msra.mxu0 %v365
    %535 = vmatprep.subr.mxu0 0.0
    %536 = vmatpush1.msra.mxu0 %v366
    %537 = vmatprep.subr.mxu0 0.0
    %538 = vmatpush1.msra.mxu0 %v367
    %539 = vmatprep.subr.mxu0 0.0
    %540 = vmatpush1.msra.mxu0 %v368
    %541 = vmatprep.subr.mxu0 0.0
    %542 = vmatpush1.msra.mxu0 %v369
    %543 = vmatprep.subr.mxu0 0.0
    %544 = vmatpush1.msra.mxu0 %v370
    %545 = vmatprep.subr.mxu0 0.0
    %546 = vmatpush1.msra.mxu0 %v371
    %547 = vmatprep.subr.mxu0 0.0
    %548 = vmatpush1.msra.mxu0 %v372
    %549 = vmatprep.subr.mxu0 0.0
    %550 = vmatpush1.msra.mxu0 %v373
    %551 = vmatprep.subr.mxu0 0.0
    %552 = vmatpush1.msra.mxu0 %v374
    %553 = vmatprep.subr.mxu0 0.0
    %554 = vmatpush1.msra.mxu0 %v375
    %555 = vmatprep.subr.mxu0 0.0
    %556 = vmatpush1.msra.mxu0 0.0
    %557 = vmatprep.subr.mxu0 0.0
    %558 = vmatpush1.msra.mxu0 0.0
    %559 = vmatprep.subr.mxu0 0.0
    %560 = vmatpush1.msra.mxu0 0.0
    %561 = vmatprep.subr.mxu0 0.0
    %562 = vmatpush1.msra.mxu0 0.0
    %563 = vmatprep.subr.mxu0 0.0
    %564 = vmatpush1.msra.mxu0 0.0
    %565 = vmatprep.subr.mxu0 0.0
    %566 = vmatpush1.msra.mxu0 0.0
    %567 = vmatprep.subr.mxu0 0.0
    %568 = vmatpush1.msra.mxu0 0.0
    %569 = vmatprep.subr.mxu0 0.0
    %570 = vmatpush1.msra.mxu0 0.0
    %571 = vmatprep.subr.mxu0 0.0
    %572 = vmatpush1.msra.mxu0 0.0
    %573 = vmatprep.subr.mxu0 0.0
    %574 = vmatpush1.msra.mxu0 0.0
    %575 = vmatprep.subr.mxu0 0.0
    %576 = vmatpush1.msra.mxu0 0.0
    %577 = vmatprep.subr.mxu0 0.0
    %578 = vmatpush1.msra.mxu0 0.0
    %579 = vmatprep.subr.mxu0 0.0
    %580 = vmatpush1.msra.mxu0 0.0
    %581 = vmatprep.subr.mxu0 0.0
    %582 = vmatpush1.msra.mxu0 0.0
    %583 = vmatprep.subr.mxu0 0.0
    %584 = vmatpush1.msra.mxu0 0.0
    %585 = vmatprep.subr.mxu0 0.0
    %586 = vmatpush1.msra.mxu0 0.0
    %587 = vmatprep.mubr.f32.mxu0 0.0
    %588 = vmatmul.mubr.f32.gmra.mrb[0].mxu0 %v295
    %v589 = vpop.f32.mrb[0].mxu0
    %v590 = vadd.f32 %v520, %v589
    %v591 = vpop.f32.mrb[0].mxu0
    %592 = vdwg.mxu0
    %vm593 = vcmask 97280
    %594 = vst.msk [vmem:[#allocation2] sm:$0xff] %vm593, %v590
    // Predicated region
    $region22: #{tpu_custom_call.1} parent=1 // pred_check
      _
    $region23: #{tpu_custom_call.1} parent=1 // pred_check_branch
      %596 = sbr.rel (0) target = $region25
    $region24: #{tpu_custom_call.1} parent=1 // pred_region
      %s598 = ssub.s32 128, 128
      %599 = vsyncadd [#allocation3], %s598
      %s601 = sshll.u32 [#allocation2], 4
      %s602 = int_to_ptr.vmem [resolvable:$true] %s601
      %604 = dma.vmem_to_hbm [thread:$0]  %s602, 128, %s5, [#allocation3]
    $region25: #{tpu_custom_call.1} parent=1 // pred_fallthru
      _
    // Predicated region
    $region26: #{tpu_custom_call.1} parent=1 // pred_check
      _
    $region27: #{tpu_custom_call.1} parent=1 // pred_check_branch
      %606 = sbr.rel (0) target = $region29
    $region28: #{tpu_custom_call.1} parent=1 // pred_region
      %607 = dma.done [#allocation3], 128
    $region29: #{tpu_custom_call.1} parent=1 // pred_fallthru
      _
    %608 = vsyncpa [#allocation3], 1

</llo_original>
